<compile_context>
chip_gen: v7x
topology: tpu7x:2x2x1
jax: 0.10.0
libtpu: 0.0.40
codegen_flags: <defaults>
</compile_context>

<pallas_src>
import functools

import jax
import jax.numpy as jnp
from jax.experimental import pallas as pl
from jax.experimental.pallas import tpu as pltpu


_LANE = 128     # TPU lane width (layout padding accounted for in VMEM estimate)
_SUBLANE = 8    # f32 sublane width: row tiles kept multiples of this
_MiB = 1024 * 1024


def _round_up(x, m):
    return (x + m - 1) // m * m


def _prenet_fused_kernel(num_layers, compute_dtype, x_ref, *refs):
    """All Prenet layers for one row tile; intermediate activations never
    touch HBM.  refs = (w0, b0, w1, b1, ..., o_ref).  Weights are already in
    compute_dtype (pre-cast on the host); biases stay f32 for the epilogue."""
    o_ref = refs[2 * num_layers]
    h = x_ref[...]
    for l in range(num_layers):
        w = refs[2 * l][...]                       # (in_f, out_f), compute_dtype
        b = refs[2 * l + 1][...]                   # (1, out_f), f32
        y = jnp.dot(h.astype(compute_dtype), w,
                    preferred_element_type=jnp.float32)
        h = jnp.maximum(y + b, 0.0)                # f32 bias-add + ReLU
        # TODO(synk): nn.Dropout identity (eval semantics); no stochastic mask.
    o_ref[...] = h.astype(o_ref.dtype)


def _vmem_bytes_estimate(tile, in_dim, layer_dims, x_itemsize, out_itemsize,
                         param_itemsize, compute_itemsize):
    """Upper-bound VMEM footprint, including (8,128) layout padding.
    Weights/biases counted ONCE (single-buffered); streamed x/out tiles are
    double-buffered; plus live f32 activation + matmul result + cast temp."""
    def pad2(r, c):
        return _round_up(max(r, 1), _SUBLANE) * _round_up(max(c, 1), _LANE)

    w_bytes = sum(pad2(i, o) * param_itemsize + pad2(1, o) * 4
                  for i, o in layer_dims)
    max_w = max([in_dim] + [o for _, o in layer_dims])
    io_bytes = (2 * pad2(tile, in_dim) * x_itemsize
                + 2 * pad2(tile, layer_dims[-1][1]) * out_itemsize)
    act_bytes = pad2(tile, max_w) * (2 * 4 + compute_itemsize)
    return w_bytes + io_bytes + act_bytes


def init_prenet_params(key, input_size, num_layers, hidden_size,
                       dtype=jnp.float32):
    """Deterministic nn.Linear-style init: U(-1/sqrt(fan_in), 1/sqrt(fan_in))."""
    in_sizes = [input_size] + [hidden_size] * (num_layers - 1)
    out_sizes = [hidden_size] * num_layers
    params = []
    for in_f, out_f in zip(in_sizes, out_sizes):
        key, kw, kb = jax.random.split(key, 3)
        bound = 1.0 / (in_f ** 0.5)
        # Stored as (in_features, out_features) — torch weight transposed.
        w = jax.random.uniform(kw, (in_f, out_f), dtype, -bound, bound)
        b = jax.random.uniform(kb, (out_f,), dtype, -bound, bound)
        params.append((w, b))
    return params


@functools.partial(jax.jit,
                   static_argnames=("row_tile", "compute_dtype", "out_dtype"))
def prenet_forward(x, params, *, row_tile=1024,
                   compute_dtype=jnp.float32, out_dtype=None):
    """x: (B, T, input_size) -> (B, T, hidden_size). Dropout = identity (eval)."""
    B, T, D = x.shape
    n_rows = B * T
    num_layers = len(params)
    hidden = params[-1][0].shape[1]
    out_dtype = x.dtype if out_dtype is None else out_dtype

    layer_dims = [(w.shape[0], w.shape[1]) for w, _ in params]

    # --- generation-aware VMEM sizing (v5e/v6e: 128 MiB, v7x: 64 MiB), with
    # headroom left for Mosaic-internal scratch.
    try:
        vmem_cap = int(getattr(pltpu.get_tpu_info(), "vmem_capacity_bytes",
                               64 * _MiB))
    except Exception:
        vmem_cap = 64 * _MiB
    vmem_budget = max(vmem_cap - 12 * _MiB, 24 * _MiB)

    x_item = jnp.dtype(x.dtype).itemsize
    out_item = jnp.dtype(out_dtype).itemsize
    param_item = jnp.dtype(compute_dtype).itemsize
    est = functools.partial(
        _vmem_bytes_estimate, in_dim=D, layer_dims=layer_dims,
        x_itemsize=x_item, out_itemsize=out_item,
        param_itemsize=param_item, compute_itemsize=param_item)

    # Graceful fallback: if resident weights cannot fit even at the smallest
    # row tile, use the plain XLA path instead of failing to compile.
    # TODO(synk): weight-tiled (output-dim grid) fused kernel for huge hidden.
    if est(_SUBLANE) > vmem_budget:
        h = x
        for w, b in params:
            h = jnp.maximum(
                jnp.einsum("btd,dh->bth", h.astype(compute_dtype),
                           w.astype(compute_dtype),
                           preferred_element_type=jnp.float32) + b, 0.0)
        return h.astype(out_dtype)

    # --- row tiling: large HBM/MXU-friendly tiles, shrunk to the VMEM budget.
    # The ragged row tail is handled by Pallas partial blocks (grid = cdiv);
    # the activation/output are never padded or sliced in HBM.
    tile = min(_round_up(row_tile, _SUBLANE), _round_up(n_rows, _SUBLANE))
    while tile > _SUBLANE and est(tile) > vmem_budget:
        tile = _round_up(tile // 2, _SUBLANE)
    grid = pl.cdiv(n_rows, tile)

    # Host-side one-time param prep: pre-cast weights to the MXU compute dtype
    # (no per-grid-step in-kernel cast); keep the tiny bias in f32.
    flat_params = []
    in_specs = [pl.BlockSpec((tile, D), lambda i: (i, 0))]
    for w, b in params:
        in_f, out_f = w.shape
        flat_params += [w.astype(compute_dtype),
                        b.astype(jnp.float32).reshape(1, out_f)]
        # Params never change across grid steps -> single resident buffer.
        in_specs.append(pl.BlockSpec((in_f, out_f), lambda i: (0, 0),
                                     pipeline_mode=pl.Buffered(1)))
        in_specs.append(pl.BlockSpec((1, out_f), lambda i: (0, 0),
                                     pipeline_mode=pl.Buffered(1)))

    vmem_limit = int(min(max(est(tile) + 8 * _MiB, 32 * _MiB),
                         vmem_cap - 8 * _MiB))

    flops = 2 * n_rows * sum(i * o for i, o in layer_dims)
    bytes_accessed = int(n_rows * D * x_item + n_rows * hidden * out_item
                         + sum(i * o for i, o in layer_dims) * param_item)

    out = pl.pallas_call(
        functools.partial(_prenet_fused_kernel, num_layers, compute_dtype),
        out_shape=jax.ShapeDtypeStruct((n_rows, hidden), out_dtype),
        grid_spec=pltpu.PrefetchScalarGridSpec(
            num_scalar_prefetch=0,
            grid=(grid,),
            in_specs=in_specs,
            out_specs=pl.BlockSpec((tile, hidden), lambda i: (i, 0)),
        ),
        compiler_params=pltpu.CompilerParams(
            dimension_semantics=("parallel",),
            vmem_limit_bytes=vmem_limit),
        cost_estimate=pl.CostEstimate(flops=flops, transcendentals=0,
                                      bytes_accessed=bytes_accessed),
    )(x.reshape(n_rows, D), *flat_params)

    return out.reshape(B, T, hidden)


def prenet_reference(x, params):
    h = x
    for w, b in params:
        h = jnp.maximum(jnp.einsum("btd,dh->bth", h, w) + b, 0.0)
    return h


if __name__ == "__main__":
    key = jax.random.PRNGKey(0)
    k_in, k_par = jax.random.split(key)

    batch, seq, input_size = 2, 8, 32
    num_layers, hidden_size, dropout = 2, 32, 0.5  # dropout unused (eval mode)

    x = jax.random.normal(k_in, (batch, seq, input_size), dtype=jnp.float32)
    params = init_prenet_params(k_par, input_size, num_layers, hidden_size)

    # f32 path: matches the reference to 1e-5.
    out = prenet_forward(x, params)
    jax.block_until_ready(out)
    ref = prenet_reference(x, params)
    assert out.shape == (batch, seq, hidden_size)
    assert jnp.allclose(out, ref, atol=1e-5, rtol=1e-5)

    # Ragged row count: exercises partial-block (no wrapper pad/slice) path.
    x_rag = jax.random.normal(jax.random.PRNGKey(1), (2, 7, input_size),
                              dtype=jnp.float32)
    out_rag = prenet_forward(x_rag, params)
    jax.block_until_ready(out_rag)
    assert jnp.allclose(out_rag, prenet_reference(x_rag, params),
                        atol=1e-5, rtol=1e-5)

    # bf16-MXU path (full-rate on v5e/v6e/v7x): f32 accumulation, loose check.
    out_bf16 = prenet_forward(x, params, compute_dtype=jnp.bfloat16)
    jax.block_until_ready(out_bf16)
    assert jnp.allclose(out_bf16, ref, atol=5e-2, rtol=5e-2)

    print("KERNEL_OK")
</pallas_src>

<mosaic_0001>
module attributes {stable_mosaic.version = 11 : i64} {
  func.func @_prenet_fused_kernel(%arg0: i32, %arg1: memref<16x32xf32, #tpu.memory_space<vmem>>, %arg2: memref<32x32xf32, #tpu.memory_space<vmem>>, %arg3: memref<1x32xf32, #tpu.memory_space<vmem>>, %arg4: memref<32x32xf32, #tpu.memory_space<vmem>>, %arg5: memref<1x32xf32, #tpu.memory_space<vmem>>, %arg6: memref<16x32xf32, #tpu.memory_space<vmem>>) attributes {dimension_semantics = [#tpu.dimension_semantics<parallel>], iteration_bounds = array<i64: 1>, scalar_prefetch = 0 : i64, scratch_operands = 0 : i64, tpu.core_type = #tpu.core_type<tc>, window_params = [{transform_indices = @transform_0, window_bounds = array<i64: 16, 32>}, {pipeline_mode = #tpu.pipeline_mode<synchronous>, transform_indices = @transform_1, window_bounds = array<i64: 32, 32>}, {pipeline_mode = #tpu.pipeline_mode<synchronous>, transform_indices = @transform_2, window_bounds = array<i64: 1, 32>}, {pipeline_mode = #tpu.pipeline_mode<synchronous>, transform_indices = @transform_3, window_bounds = array<i64: 32, 32>}, {pipeline_mode = #tpu.pipeline_mode<synchronous>, transform_indices = @transform_4, window_bounds = array<i64: 1, 32>}, {transform_indices = @transform_5, window_bounds = array<i64: 16, 32>}]} {
    %c0 = arith.constant 0 : index
    %c0_0 = arith.constant 0 : index
    %0 = vector.load %arg1[%c0, %c0_0] : memref<16x32xf32, #tpu.memory_space<vmem>>, vector<16x32xf32>
    %c0_1 = arith.constant 0 : index
    %c0_2 = arith.constant 0 : index
    %1 = vector.load %arg2[%c0_1, %c0_2] : memref<32x32xf32, #tpu.memory_space<vmem>>, vector<32x32xf32>
    %c0_3 = arith.constant 0 : index
    %c0_4 = arith.constant 0 : index
    %2 = vector.load %arg3[%c0_3, %c0_4] : memref<1x32xf32, #tpu.memory_space<vmem>>, vector<1x32xf32>
    %cst = arith.constant dense<0.000000e+00> : vector<16x32xf32>
    %3 = tpu.matmul %0, %1, %cst {dimension_numbers = #tpu.dot_dimension_numbers<[1], [0], [0], [1], [0, 0, 1, 1], [], []>} : vector<16x32xf32>, vector<32x32xf32>, vector<16x32xf32> -> vector<16x32xf32>
    %4 = vector.broadcast %2 : vector<1x32xf32> to vector<16x32xf32>
    %5 = arith.addf %3, %4 : vector<16x32xf32>
    %cst_5 = arith.constant 0.000000e+00 : f32
    %6 = vector.broadcast %cst_5 : f32 to vector<16x32xf32>
    %7 = arith.maximumf %5, %6 : vector<16x32xf32>
    %c0_6 = arith.constant 0 : index
    %c0_7 = arith.constant 0 : index
    %8 = vector.load %arg4[%c0_6, %c0_7] : memref<32x32xf32, #tpu.memory_space<vmem>>, vector<32x32xf32>
    %c0_8 = arith.constant 0 : index
    %c0_9 = arith.constant 0 : index
    %9 = vector.load %arg5[%c0_8, %c0_9] : memref<1x32xf32, #tpu.memory_space<vmem>>, vector<1x32xf32>
    %cst_10 = arith.constant dense<0.000000e+00> : vector<16x32xf32>
    %10 = tpu.matmul %7, %8, %cst_10 {dimension_numbers = #tpu.dot_dimension_numbers<[1], [0], [0], [1], [0, 0, 1, 1], [], []>} : vector<16x32xf32>, vector<32x32xf32>, vector<16x32xf32> -> vector<16x32xf32>
    %11 = vector.broadcast %9 : vector<1x32xf32> to vector<16x32xf32>
    %12 = arith.addf %10, %11 : vector<16x32xf32>
    %cst_11 = arith.constant 0.000000e+00 : f32
    %13 = vector.broadcast %cst_11 : f32 to vector<16x32xf32>
    %14 = arith.maximumf %12, %13 : vector<16x32xf32>
    %c0_12 = arith.constant 0 : index
    %c0_13 = arith.constant 0 : index
    %15 = vector.load %arg6[%c0_12, %c0_13] : memref<16x32xf32, #tpu.memory_space<vmem>>, vector<16x32xf32>
    tpu.vector_store %arg6[%c0_12, %c0_13], %14 {strides = array<i32>} : memref<16x32xf32, #tpu.memory_space<vmem>>, vector<16x32xf32>,
    return
  }
  func.func @transform_0(%arg0: i32) -> (i32, i32) {
    %c0_i32 = arith.constant 0 : i32
    %c0_i32_0 = arith.constant 0 : i32
    return %arg0, %c0_i32 : i32, i32
  }
  func.func @transform_1(%arg0: i32) -> (i32, i32) {
    %c0_i32 = arith.constant 0 : i32
    %c0_i32_0 = arith.constant 0 : i32
    %c0_i32_1 = arith.constant 0 : i32
    return %c0_i32, %c0_i32_0 : i32, i32
  }
  func.func @transform_2(%arg0: i32) -> (i32, i32) {
    %c0_i32 = arith.constant 0 : i32
    %c0_i32_0 = arith.constant 0 : i32
    %c0_i32_1 = arith.constant 0 : i32
    return %c0_i32, %c0_i32_0 : i32, i32
  }
  func.func @transform_3(%arg0: i32) -> (i32, i32) {
    %c0_i32 = arith.constant 0 : i32
    %c0_i32_0 = arith.constant 0 : i32
    %c0_i32_1 = arith.constant 0 : i32
    return %c0_i32, %c0_i32_0 : i32, i32
  }
  func.func @transform_4(%arg0: i32) -> (i32, i32) {
    %c0_i32 = arith.constant 0 : i32
    %c0_i32_0 = arith.constant 0 : i32
    %c0_i32_1 = arith.constant 0 : i32
    return %c0_i32, %c0_i32_0 : i32, i32
  }
  func.func @transform_5(%arg0: i32) -> (i32, i32) {
    %c0_i32 = arith.constant 0 : i32
    %c0_i32_0 = arith.constant 0 : i32
    return %arg0, %c0_i32 : i32, i32
  }
}

</mosaic_0001>

<llo_original>
// kernel: prenet_forward.1
$region0: #{prenet_forward.1}
  #allocation0 [shape = 'u32[]', space=smem, size = 0x4, offset = 0x4, fixed_abs, tag = 'smem constant byte address 0x4 - core index']
  #allocation1 [shape = 'u32[144,128]{1,0:T(1,128)}', space=vmem, size = 0x12000, scoped, tag = 'internal scratch']
  %s0 = inlined_call_operand.hbm [shape: f32[16,32], index: 0, kind: input, shape index: {}]
  %s1 = inlined_call_operand.hbm [shape: f32[32,32], index: 1, kind: input, shape index: {}]
  %s2 = inlined_call_operand.vmem [shape: f32[1,32], index: 2, kind: input, shape index: {}]
  %s3 = inlined_call_operand.hbm [shape: f32[32,32], index: 3, kind: input, shape index: {}]
  %s4 = inlined_call_operand.vmem [shape: f32[1,32], index: 4, kind: input, shape index: {}]
  %s5 = inlined_call_operand.hbm [shape: f32[16,32], index: 5, kind: output, shape index: {}]
  %s6 = sld [smem:[#allocation0]]
  $region42: #{prenet_forward.1} parent=0
    _
  %s8 = ssub.s32 1, %s6
  %s9 = scalar_select 0, %s8, %s6
  $region1: #{prenet_forward.1} parent=0
    #allocation2 [shape = 'u8[8192]{0}', space=vmem, size = 0x2000, scoped, tag = 'input window, operand 0, single buffered']
    #allocation3 [shape = 's32[1]{0}', space=sflag, size = 0x4, scoped, tag = 'scoped memory for prenet_forward.1']
    #allocation4 [shape = 's32[1]{0}', space=sflag, size = 0x4, scoped, tag = 'scoped memory for prenet_forward.1']
    #allocation5 [shape = 'u8[16384]{0}', space=vmem, size = 0x4000, scoped, tag = 'input window, operand 1, single buffered']
    #allocation6 [shape = 's32[1]{0}', space=sflag, size = 0x4, scoped, tag = 'scoped memory for prenet_forward.1']
    #allocation7 [shape = 'u8[16384]{0}', space=vmem, size = 0x4000, scoped, tag = 'input window, operand 3, single buffered']
    #allocation8 [shape = 'u8[8192]{0}', space=vmem, size = 0x2000, scoped, tag = 'output window, operand 0, single buffered']
    %10 = vsyncpa [#allocation3], 0
    %11 = vsyncpa [#allocation6], 0
    %12 = vsyncpa [#allocation4], 0
    // Predicated region
    $region2: #{prenet_forward.1} parent=1 // pred_check
      _
    $region3: #{prenet_forward.1} parent=1 // pred_check_branch
      %14 = sbr.rel (0) target = $region5
    $region4: #{prenet_forward.1} parent=1 // pred_region
      %s16 = ssub.s32 256, 256
      %17 = vsyncadd [#allocation3], %s16
      %s18 = sshll.u32 [#allocation2], 4
      %s19 = int_to_ptr.vmem [resolvable:$true] %s18
      %24 = dma.hbm_to_vmem [thread:$0]  %s0, 256, %s19, [#allocation3], 128, 128, 8
    $region5: #{prenet_forward.1} parent=1 // pred_fallthru
      _
    // Predicated region
    $region6: #{prenet_forward.1} parent=1 // pred_check
      _
    $region7: #{prenet_forward.1} parent=1 // pred_check_branch
      %26 = sbr.rel (0) target = $region9
    $region8: #{prenet_forward.1} parent=1 // pred_region
      %s28 = ssub.s32 512, 512
      %29 = vsyncadd [#allocation6], %s28
      %s30 = sshll.u32 [#allocation5], 4
      %s31 = int_to_ptr.vmem [resolvable:$true] %s30
      %36 = dma.hbm_to_vmem [thread:$0]  %s1, 512, %s31, [#allocation6], 128, 128, 8
    $region9: #{prenet_forward.1} parent=1 // pred_fallthru
      _
    // Predicated region
    $region10: #{prenet_forward.1} parent=1 // pred_check
      _
    $region11: #{prenet_forward.1} parent=1 // pred_check_branch
      %38 = sbr.rel (0) target = $region13
    $region12: #{prenet_forward.1} parent=1 // pred_region
      _
    $region13: #{prenet_forward.1} parent=1 // pred_fallthru
      _
    // Predicated region
    $region14: #{prenet_forward.1} parent=1 // pred_check
      _
    $region15: #{prenet_forward.1} parent=1 // pred_check_branch
      %40 = sbr.rel (0) target = $region17
    $region16: #{prenet_forward.1} parent=1 // pred_region
      %s42 = ssub.s32 512, 512
      %43 = vsyncadd [#allocation6], %s42
      %s44 = sshll.u32 [#allocation7], 4
      %s45 = int_to_ptr.vmem [resolvable:$true] %s44
      %50 = dma.hbm_to_vmem [thread:$0]  %s3, 512, %s45, [#allocation6], 128, 128, 8
    $region17: #{prenet_forward.1} parent=1 // pred_fallthru
      _
    // Predicated region
    $region18: #{prenet_forward.1} parent=1 // pred_check
      _
    $region19: #{prenet_forward.1} parent=1 // pred_check_branch
      %52 = sbr.rel (0) target = $region21
    $region20: #{prenet_forward.1} parent=1 // pred_region
      _
    $region21: #{prenet_forward.1} parent=1 // pred_fallthru
      _
    // Predicated region
    $region22: #{prenet_forward.1} parent=1 // pred_check
      _
    $region23: #{prenet_forward.1} parent=1 // pred_check_branch
      %54 = sbr.rel (0) target = $region25
    $region24: #{prenet_forward.1} parent=1 // pred_region
      %55 = dma.done [#allocation3], 256
    $region25: #{prenet_forward.1} parent=1 // pred_fallthru
      _
    // Predicated region
    $region26: #{prenet_forward.1} parent=1 // pred_check
      _
    $region27: #{prenet_forward.1} parent=1 // pred_check_branch
      %57 = sbr.rel (0) target = $region29
    $region28: #{prenet_forward.1} parent=1 // pred_region
      %58 = dma.done [#allocation6], 512
    $region29: #{prenet_forward.1} parent=1 // pred_fallthru
      _
    // Predicated region
    $region30: #{prenet_forward.1} parent=1 // pred_check
      _
    $region31: #{prenet_forward.1} parent=1 // pred_check_branch
      %60 = sbr.rel (0) target = $region33
    $region32: #{prenet_forward.1} parent=1 // pred_region
      %61 = dma.done [#allocation6], 512
    $region33: #{prenet_forward.1} parent=1 // pred_fallthru
      _
    %v62 = vld [vmem:[#allocation2] sm:$0xff]
    %v63 = vld [vmem:[#allocation2 + $0x8] sm:$0xff]
    %v64 = vld [vmem:[#allocation5] sm:$0xff]
    %v65 = vld [vmem:[#allocation5 + $0x8] sm:$0xff]
    %v66 = vld [vmem:[#allocation5 + $0x10] sm:$0xff]
    %v67 = vld [vmem:[#allocation5 + $0x18] sm:$0xff]
    %v68 = vld [vmem:[%s2] sm:$0x1]
    %v70 = vlaneseq
    %v71 = vshrl.u32 %v70, 7
    %v72 = vsub.s32 0, %v71
    %v73 = vrot.slane %v68, %v72
    %vm75 = vcmask 261120
    %v77 = vsel %vm75, %v62, 0
    %v80 = vsel %vm75, %v63, 0
    %82 = vmatprep.subr.mxu0 0.0
    %83 = vmatpush1.msra.mxu0 %v64
    %84 = vmatprep.subr.mxu0 0.0
    %85 = vmatpush1.msra.mxu0 %v65
    %86 = vmatprep.subr.mxu0 0.0
    %87 = vmatpush1.msra.mxu0 %v66
    %88 = vmatprep.subr.mxu0 0.0
    %89 = vmatpush1.msra.mxu0 %v67
    %90 = vmatprep.subr.mxu0 0.0
    %91 = vmatpush1.msra.mxu0 0.0
    %92 = vmatprep.subr.mxu0 0.0
    %93 = vmatpush1.msra.mxu0 0.0
    %94 = vmatprep.subr.mxu0 0.0
    %95 = vmatpush1.msra.mxu0 0.0
    %96 = vmatprep.subr.mxu0 0.0
    %97 = vmatpush1.msra.mxu0 0.0
    %98 = vmatprep.subr.mxu0 0.0
    %99 = vmatpush1.msra.mxu0 0.0
    %100 = vmatprep.subr.mxu0 0.0
    %101 = vmatpush1.msra.mxu0 0.0
    %102 = vmatprep.subr.mxu0 0.0
    %103 = vmatpush1.msra.mxu0 0.0
    %104 = vmatprep.subr.mxu0 0.0
    %105 = vmatpush1.msra.mxu0 0.0
    %106 = vmatprep.subr.mxu0 0.0
    %107 = vmatpush1.msra.mxu0 0.0
    %108 = vmatprep.subr.mxu0 0.0
    %109 = vmatpush1.msra.mxu0 0.0
    %110 = vmatprep.subr.mxu0 0.0
    %111 = vmatpush1.msra.mxu0 0.0
    %112 = vmatprep.subr.mxu0 0.0
    %113 = vmatpush1.msra.mxu0 0.0
    %114 = vmatprep.subr.mxu0 0.0
    %115 = vmatpush1.msra.mxu0 0.0
    %116 = vmatprep.subr.mxu0 0.0
    %117 = vmatpush1.msra.mxu0 0.0
    %118 = vmatprep.subr.mxu0 0.0
    %119 = vmatpush1.msra.mxu0 0.0
    %120 = vmatprep.subr.mxu0 0.0
    %121 = vmatpush1.msra.mxu0 0.0
    %122 = vmatprep.subr.mxu0 0.0
    %123 = vmatpush1.msra.mxu0 0.0
    %124 = vmatprep.subr.mxu0 0.0
    %125 = vmatpush1.msra.mxu0 0.0
    %126 = vmatprep.subr.mxu0 0.0
    %127 = vmatpush1.msra.mxu0 0.0
    %128 = vmatprep.subr.mxu0 0.0
    %129 = vmatpush1.msra.mxu0 0.0
    %130 = vmatprep.subr.mxu0 0.0
    %131 = vmatpush1.msra.mxu0 0.0
    %132 = vmatprep.subr.mxu0 0.0
    %133 = vmatpush1.msra.mxu0 0.0
    %134 = vmatprep.subr.mxu0 0.0
    %135 = vmatpush1.msra.mxu0 0.0
    %136 = vmatprep.subr.mxu0 0.0
    %137 = vmatpush1.msra.mxu0 0.0
    %138 = vmatprep.subr.mxu0 0.0
    %139 = vmatpush1.msra.mxu0 0.0
    %140 = vmatprep.subr.mxu0 0.0
    %141 = vmatpush1.msra.mxu0 0.0
    %142 = vmatprep.subr.mxu0 0.0
    %143 = vmatpush1.msra.mxu0 0.0
    %144 = vmatprep.subr.mxu0 0.0
    %145 = vmatpush1.msra.mxu0 0.0
    %146 = vmatprep.mubr.f32.mxu0 0.0
    %147 = vmatmul.mubr.f32.gmra.mrb[0].mxu0 %v77
    %v148 = vpop.f32.mrb[0].mxu0
    %v149 = vadd.f32 %v73, %v148
    %v150 = vpop.f32.mrb[0].mxu0
    %151 = vmatprep.mubr.f32.mxu0 0.0
    %152 = vmatmul.mubr.f32.gmra.mrb[0].mxu0 %v80
    %v153 = vpop.f32.mrb[0].mxu0
    %v154 = vadd.f32 %v73, %v153
    %v155 = vpop.f32.mrb[0].mxu0
    %156 = vdwg.mxu0
    %v157 = vmax.f32 %v149, 0.0
    %v158 = vmax.f32 %v154, 0.0
    %v159 = vld [vmem:[#allocation7] sm:$0xff]
    %v160 = vld [vmem:[#allocation7 + $0x8] sm:$0xff]
    %v161 = vld [vmem:[#allocation7 + $0x10] sm:$0xff]
    %v162 = vld [vmem:[#allocation7 + $0x18] sm:$0xff]
    %v163 = vld [vmem:[%s4] sm:$0x1]
    %v165 = vlaneseq
    %v166 = vshrl.u32 %v165, 7
    %v167 = vsub.s32 0, %v166
    %v168 = vrot.slane %v163, %v167
    %v171 = vsel %vm75, %v157, 0
    %v174 = vsel %vm75, %v158, 0
    %176 = vmatprep.subr.mxu0 0.0
    %177 = vmatpush1.msra.mxu0 %v159
    %178 = vmatprep.subr.mxu0 0.0
    %179 = vmatpush1.msra.mxu0 %v160
    %180 = vmatprep.subr.mxu0 0.0
    %181 = vmatpush1.msra.mxu0 %v161
    %182 = vmatprep.subr.mxu0 0.0
    %183 = vmatpush1.msra.mxu0 %v162
    %184 = vmatprep.subr.mxu0 0.0
    %185 = vmatpush1.msra.mxu0 0.0
    %186 = vmatprep.subr.mxu0 0.0
    %187 = vmatpush1.msra.mxu0 0.0
    %188 = vmatprep.subr.mxu0 0.0
    %189 = vmatpush1.msra.mxu0 0.0
    %190 = vmatprep.subr.mxu0 0.0
    %191 = vmatpush1.msra.mxu0 0.0
    %192 = vmatprep.subr.mxu0 0.0
    %193 = vmatpush1.msra.mxu0 0.0
    %194 = vmatprep.subr.mxu0 0.0
    %195 = vmatpush1.msra.mxu0 0.0
    %196 = vmatprep.subr.mxu0 0.0
    %197 = vmatpush1.msra.mxu0 0.0
    %198 = vmatprep.subr.mxu0 0.0
    %199 = vmatpush1.msra.mxu0 0.0
    %200 = vmatprep.subr.mxu0 0.0
    %201 = vmatpush1.msra.mxu0 0.0
    %202 = vmatprep.subr.mxu0 0.0
    %203 = vmatpush1.msra.mxu0 0.0
    %204 = vmatprep.subr.mxu0 0.0
    %205 = vmatpush1.msra.mxu0 0.0
    %206 = vmatprep.subr.mxu0 0.0
    %207 = vmatpush1.msra.mxu0 0.0
    %208 = vmatprep.subr.mxu0 0.0
    %209 = vmatpush1.msra.mxu0 0.0
    %210 = vmatprep.subr.mxu0 0.0
    %211 = vmatpush1.msra.mxu0 0.0
    %212 = vmatprep.subr.mxu0 0.0
    %213 = vmatpush1.msra.mxu0 0.0
    %214 = vmatprep.subr.mxu0 0.0
    %215 = vmatpush1.msra.mxu0 0.0
    %216 = vmatprep.subr.mxu0 0.0
    %217 = vmatpush1.msra.mxu0 0.0
    %218 = vmatprep.subr.mxu0 0.0
    %219 = vmatpush1.msra.mxu0 0.0
    %220 = vmatprep.subr.mxu0 0.0
    %221 = vmatpush1.msra.mxu0 0.0
    %222 = vmatprep.subr.mxu0 0.0
    %223 = vmatpush1.msra.mxu0 0.0
    %224 = vmatprep.subr.mxu0 0.0
    %225 = vmatpush1.msra.mxu0 0.0
    %226 = vmatprep.subr.mxu0 0.0
    %227 = vmatpush1.msra.mxu0 0.0
    %228 = vmatprep.subr.mxu0 0.0
    %229 = vmatpush1.msra.mxu0 0.0
    %230 = vmatprep.subr.mxu0 0.0
    %231 = vmatpush1.msra.mxu0 0.0
    %232 = vmatprep.subr.mxu0 0.0
    %233 = vmatpush1.msra.mxu0 0.0
    %234 = vmatprep.subr.mxu0 0.0
    %235 = vmatpush1.msra.mxu0 0.0
    %236 = vmatprep.subr.mxu0 0.0
    %237 = vmatpush1.msra.mxu0 0.0
    %238 = vmatprep.subr.mxu0 0.0
    %239 = vmatpush1.msra.mxu0 0.0
    %240 = vmatprep.mubr.f32.mxu0 0.0
    %241 = vmatmul.mubr.f32.gmra.mrb[0].mxu0 %v171
    %v242 = vpop.f32.mrb[0].mxu0
    %v243 = vadd.f32 %v168, %v242
    %v244 = vpop.f32.mrb[0].mxu0
    %245 = vmatprep.mubr.f32.mxu0 0.0
    %246 = vmatmul.mubr.f32.gmra.mrb[0].mxu0 %v174
    %v247 = vpop.f32.mrb[0].mxu0
    %v248 = vadd.f32 %v168, %v247
    %v249 = vpop.f32.mrb[0].mxu0
    %250 = vdwg.mxu0
    %v251 = vmax.f32 %v243, 0.0
    %v252 = vmax.f32 %v248, 0.0
    %253 = vst.msk [vmem:[#allocation8] sm:$0xff] %vm75, %v251
    %254 = vst.msk [vmem:[#allocation8 + $0x8] sm:$0xff] %vm75, %v252
    // Predicated region
    $region34: #{prenet_forward.1} parent=1 // pred_check
      _
    $region35: #{prenet_forward.1} parent=1 // pred_check_branch
      %256 = sbr.rel (0) target = $region37
    $region36: #{prenet_forward.1} parent=1 // pred_region
      %s258 = ssub.s32 256, 256
      %259 = vsyncadd [#allocation4], %s258
      %s260 = sshll.u32 [#allocation8], 4
      %s261 = int_to_ptr.vmem [resolvable:$true] %s260
      %266 = dma.vmem_to_hbm [thread:$0]  %s261, 256, %s5, [#allocation4], 128, 128, 8
    $region37: #{prenet_forward.1} parent=1 // pred_fallthru
      _
    // Predicated region
    $region38: #{prenet_forward.1} parent=1 // pred_check
      _
    $region39: #{prenet_forward.1} parent=1 // pred_check_branch
      %268 = sbr.rel (0) target = $region41
    $region40: #{prenet_forward.1} parent=1 // pred_region
      %269 = dma.done [#allocation4], 256
    $region41: #{prenet_forward.1} parent=1 // pred_fallthru
      _
    %270 = vsyncpa [#allocation3], 1
    %271 = vsyncpa [#allocation6], 1
    %272 = vsyncpa [#allocation4], 1

</llo_original>
